<compile_context>
chip_gen: v7x
topology: tpu7x:2x2x1
jax: 0.10.0
libtpu: 0.0.40
codegen_flags: <defaults>
</compile_context>

<pallas_src>
import jax
import jax.numpy as jnp
from jax.experimental import pallas as pl
from jax.experimental.pallas import tpu as pltpu


# ------------------------------- Pallas kernel -------------------------------

def _pconv_kernel(x_ref, m_ref, w_ref, b_ref, out_ref, nmask_ref):
    # x_ref:     (1, T, Kc)   bf16  masked-input im2col patches
    # m_ref:     (1, T, Kc)   f32   mask im2col patches
    # w_ref:     (Kc, Cout)   bf16  merged-K weights
    # b_ref:     (1, Cout)    f32   bias (zeros when bias=None)
    # out_ref:   (1, T, Cout) f32
    # nmask_ref: (1, T, Cout) f32
    acc = jnp.dot(x_ref[0], w_ref[...], preferred_element_type=jnp.float32)
    # mask conv with all-ones weights == row-sum of the mask patch (exact in f32)
    mask_sum = jnp.sum(m_ref[0], axis=-1, keepdims=True)        # (T, 1)
    holes = mask_sum == 0.0
    mask_sum = jnp.where(holes, 1.0, mask_sum)
    out = acc / mask_sum + b_ref[...]
    out_ref[0] = jnp.where(holes, jnp.zeros_like(out), out)
    nmask_ref[0] = jnp.where(holes, jnp.zeros_like(out), jnp.ones_like(out))


# --------------------------------- glue / API ---------------------------------

def _round_up(x, m):
    return (x + m - 1) // m * m


def _im2col(x_nhwc, kh, kw, stride, padding, dilation):
    """Extract conv patches; returns (B, Ho*Wo, kh*kw*C), K ordered (ky, kx, c)."""
    B, H, W, C = x_nhwc.shape
    sh = sw = stride
    ph = pw = padding
    dh = dw = dilation
    xp = jnp.pad(x_nhwc, ((0, 0), (ph, ph), (pw, pw), (0, 0)))
    Hp, Wp = H + 2 * ph, W + 2 * pw
    Ho = (Hp - dh * (kh - 1) - 1) // sh + 1
    Wo = (Wp - dw * (kw - 1) - 1) // sw + 1
    cols = []
    for iy in range(kh):
        for ix in range(kw):
            cols.append(xp[:, iy * dh: iy * dh + (Ho - 1) * sh + 1: sh,
                           ix * dw: ix * dw + (Wo - 1) * sw + 1: sw, :])
    patches = jnp.concatenate(cols, axis=-1).reshape(B, Ho * Wo, kh * kw * C)
    return patches, Ho, Wo


def partial_conv(inp_nchw, mask_nchw, w_oihw, bias, *, stride=1, padding=0,
                 dilation=1, tile_hw=None, vmem_budget_bytes=8 * 1024 * 1024):
    """PartialConv forward.

    inp_nchw, mask_nchw: (B, Cin, H, W) f32 (PyTorch layout).
    w_oihw: (Cout, Cin, kh, kw) f32.  bias: (Cout,) f32 or None.
    Returns (output, new_mask), both (B, Cout, Ho, Wo) f32.
    """
    B, Cin, H, W = inp_nchw.shape
    Cout, Cin_w, kh, kw = w_oihw.shape
    assert Cin == Cin_w  # groups != 1 not supported
    Kc = kh * kw * Cin

    inp = jnp.transpose(inp_nchw, (0, 2, 3, 1))   # NCHW -> NHWC (channels on lanes)
    msk = jnp.transpose(mask_nchw, (0, 2, 3, 1))

    x_patches, Ho, Wo = _im2col(inp * msk, kh, kw, stride, padding, dilation)
    m_patches, _, _ = _im2col(msk, kh, kw, stride, padding, dilation)
    HWo = Ho * Wo

    # Spatial tile: multiple of 8 sublanes, sized against a modest per-step VMEM
    # budget (double-buffered inputs + both outputs) so it fits all generations.
    if tile_hw is None:
        per_row = 2 * (Kc * 2 + Kc * 4) + 2 * (2 * Cout * 4)
        tile_hw = max(8, min(4096, (vmem_budget_bytes // per_row) // 8 * 8))
    tile = min(tile_hw, _round_up(HWo, 8))
    tile = max(8, (tile // 8) * 8)
    HWp = _round_up(HWo, tile)
    n_tiles = HWp // tile

    pad_rows = HWp - HWo
    if pad_rows:
        # padded rows have all-zero mask patches -> holes -> 0 output; sliced off.
        x_patches = jnp.pad(x_patches, ((0, 0), (0, pad_rows), (0, 0)))
        m_patches = jnp.pad(m_patches, ((0, 0), (0, pad_rows), (0, 0)))

    x_bf16 = x_patches.astype(jnp.bfloat16)
    m_f32 = m_patches.astype(jnp.float32)
    # (Cout, Cin, kh, kw) -> (kh, kw, Cin, Cout) -> (Kc, Cout) matching im2col K order
    w_mat = jnp.transpose(w_oihw, (2, 3, 1, 0)).reshape(Kc, Cout).astype(jnp.bfloat16)
    b_vec = (jnp.zeros((Cout,), jnp.float32) if bias is None
             else bias.astype(jnp.float32)).reshape(1, Cout)

    cost = pl.CostEstimate(
        flops=2 * B * HWp * Kc * Cout,
        transcendentals=0,
        bytes_accessed=(x_bf16.size * 2 + m_f32.size * 4 + w_mat.size * 2
                        + b_vec.size * 4 + 2 * B * HWp * Cout * 4),
    )

    out, new_mask = pl.pallas_call(
        _pconv_kernel,
        out_shape=(jax.ShapeDtypeStruct((B, HWp, Cout), jnp.float32),
                   jax.ShapeDtypeStruct((B, HWp, Cout), jnp.float32)),
        grid=(B, n_tiles),
        in_specs=[
            pl.BlockSpec((1, tile, Kc), lambda b, t: (b, t, 0)),
            pl.BlockSpec((1, tile, Kc), lambda b, t: (b, t, 0)),
            pl.BlockSpec((Kc, Cout), lambda b, t: (0, 0)),   # VMEM-resident weights
            pl.BlockSpec((1, Cout), lambda b, t: (0, 0)),    # VMEM-resident bias
        ],
        out_specs=(
            pl.BlockSpec((1, tile, Cout), lambda b, t: (b, t, 0)),
            pl.BlockSpec((1, tile, Cout), lambda b, t: (b, t, 0)),
        ),
        compiler_params=pltpu.CompilerParams(
            dimension_semantics=("parallel", "parallel"),
            vmem_limit_bytes=32 * 1024 * 1024,
        ),
        cost_estimate=cost,
    )(x_bf16, m_f32, w_mat, b_vec)

    out = out[:, :HWo].reshape(B, Ho, Wo, Cout)
    new_mask = new_mask[:, :HWo].reshape(B, Ho, Wo, Cout)
    return (jnp.transpose(out, (0, 3, 1, 2)),
            jnp.transpose(new_mask, (0, 3, 1, 2)))


# ------------------------------------ test ------------------------------------

if __name__ == "__main__":
    from jax import lax

    def reference(inp, mask, w, b, stride, padding, dilation):
        dn = ("NCHW", "OIHW", "NCHW")

        def conv(x, k):
            return lax.conv_general_dilated(
                x, k, (stride, stride), [(padding, padding)] * 2,
                rhs_dilation=(dilation, dilation), dimension_numbers=dn,
                precision=lax.Precision.HIGHEST)

        out = conv(inp * mask, w)
        msum = conv(mask, jnp.ones_like(w))
        holes = msum == 0.0
        msum = jnp.where(holes, 1.0, msum)
        b_term = 0.0 if b is None else b.reshape(1, -1, 1, 1)
        out = jnp.where(holes, 0.0, out / msum + b_term)
        nmask = jnp.where(holes, 0.0, jnp.ones_like(out))
        return out, nmask

    key = jax.random.PRNGKey(0)
    k1, k2, k3, k4 = jax.random.split(key, 4)
    B, Cin, H, W = 2, 4, 16, 16
    Cout, K = 32, 3

    inp = jax.random.normal(k1, (B, Cin, H, W), jnp.float32)
    mask = (jax.random.uniform(k2, (B, Cin, H, W)) > 0.4).astype(jnp.float32)
    w = jax.random.normal(k3, (Cout, Cin, K, K), jnp.float32) * (2.0 / (Cin * K * K)) ** 0.5
    b = jax.random.normal(k4, (Cout,), jnp.float32) * 0.1

    # Covers the "increasing dilation" variants of the original file.
    for stride, padding, dilation in [(1, 1, 1), (1, 2, 2), (2, 1, 1)]:
        fn = jax.jit(lambda i, m, s=stride, p=padding, d=dilation:
                     partial_conv(i, m, w, b, stride=s, padding=p, dilation=d))
        out, nmask = fn(inp, mask)
        jax.block_until_ready(out)
        jax.block_until_ready(nmask)

        ref_out, ref_mask = reference(inp, mask, w, b, stride, padding, dilation)
        assert out.shape == ref_out.shape and nmask.shape == ref_mask.shape
        assert out.dtype == jnp.float32 and nmask.dtype == jnp.float32
        assert bool(jnp.array_equal(nmask, ref_mask))          # holes match exactly
        err = float(jnp.max(jnp.abs(out - ref_out)))
        assert err < 0.1, f"max abs err {err} (stride={stride}, dil={dilation})"

    print("KERNEL_OK")
</pallas_src>

<mosaic_0001>
module attributes {stable_mosaic.version = 11 : i64} {
  func.func @_pconv_kernel(%arg0: i32, %arg1: i32, %arg2: memref<1x256x36xbf16, #tpu.memory_space<vmem>>, %arg3: memref<1x256x36xf32, #tpu.memory_space<vmem>>, %arg4: memref<36x32xbf16, #tpu.memory_space<vmem>>, %arg5: memref<1x32xf32, #tpu.memory_space<vmem>>, %arg6: memref<1x256x32xf32, #tpu.memory_space<vmem>>, %arg7: memref<1x256x32xf32, #tpu.memory_space<vmem>>) attributes {dimension_semantics = [#tpu.dimension_semantics<parallel>, #tpu.dimension_semantics<parallel>], iteration_bounds = array<i64: 2, 1>, scalar_prefetch = 0 : i64, scratch_operands = 0 : i64, tpu.core_type = #tpu.core_type<tc>, window_params = [{transform_indices = @transform_0, window_bounds = array<i64: 1, 256, 36>}, {transform_indices = @transform_1, window_bounds = array<i64: 1, 256, 36>}, {pipeline_mode = #tpu.pipeline_mode<synchronous>, transform_indices = @transform_2, window_bounds = array<i64: 36, 32>}, {pipeline_mode = #tpu.pipeline_mode<synchronous>, transform_indices = @transform_3, window_bounds = array<i64: 1, 32>}, {transform_indices = @transform_4, window_bounds = array<i64: 1, 256, 32>}, {transform_indices = @transform_5, window_bounds = array<i64: 1, 256, 32>}]} {
    %c0 = arith.constant 0 : index
    %c0_0 = arith.constant 0 : index
    %c0_1 = arith.constant 0 : index
    %0 = vector.load %arg2[%c0, %c0_0, %c0_1] : memref<1x256x36xbf16, #tpu.memory_space<vmem>>, vector<1x256x36xbf16>
    %1 = vector.shape_cast %0 : vector<1x256x36xbf16> to vector<256x36xbf16>
    %c0_2 = arith.constant 0 : index
    %c0_3 = arith.constant 0 : index
    %2 = vector.load %arg4[%c0_2, %c0_3] : memref<36x32xbf16, #tpu.memory_space<vmem>>, vector<36x32xbf16>
    %cst = arith.constant dense<0.000000e+00> : vector<256x32xf32>
    %3 = tpu.matmul %1, %2, %cst {dimension_numbers = #tpu.dot_dimension_numbers<[1], [0], [0], [1], [0, 0, 1, 1], [], []>} : vector<256x36xbf16>, vector<36x32xbf16>, vector<256x32xf32> -> vector<256x32xf32>
    %c0_4 = arith.constant 0 : index
    %c0_5 = arith.constant 0 : index
    %c0_6 = arith.constant 0 : index
    %4 = vector.load %arg3[%c0_4, %c0_5, %c0_6] : memref<1x256x36xf32, #tpu.memory_space<vmem>>, vector<1x256x36xf32>
    %5 = vector.shape_cast %4 : vector<1x256x36xf32> to vector<256x36xf32>
    %cst_7 = arith.constant dense<0.000000e+00> : vector<256xf32>
    %6 = vector.multi_reduction <add>, %5, %cst_7 [1] : vector<256x36xf32> to vector<256xf32>
    %7 = vector.shape_cast %6 : vector<256xf32> to vector<256x1xf32>
    %cst_8 = arith.constant 0.000000e+00 : f32
    %8 = vector.broadcast %cst_8 : f32 to vector<256x1xf32>
    %9 = arith.cmpf oeq, %7, %8 : vector<256x1xf32>
    %cst_9 = arith.constant 1.000000e+00 : f32
    %10 = vector.broadcast %cst_9 : f32 to vector<256x1xf32>
    %11 = arith.select %9, %10, %7 : vector<256x1xi1>, vector<256x1xf32>
    %12 = vector.broadcast %11 : vector<256x1xf32> to vector<256x32xf32>
    %13 = arith.divf %3, %12 : vector<256x32xf32>
    %c0_10 = arith.constant 0 : index
    %c0_11 = arith.constant 0 : index
    %14 = vector.load %arg5[%c0_10, %c0_11] : memref<1x32xf32, #tpu.memory_space<vmem>>, vector<1x32xf32>
    %15 = vector.broadcast %14 : vector<1x32xf32> to vector<256x32xf32>
    %16 = arith.addf %13, %15 : vector<256x32xf32>
    %cst_12 = arith.constant 0.000000e+00 : f32
    %17 = vector.broadcast %cst_12 : f32 to vector<256x32xf32>
    %18 = vector.shape_cast %9 : vector<256x1xi1> to vector<256x1xi1>
    %19 = vector.broadcast %18 : vector<256x1xi1> to vector<256x32xi1>
    %20 = arith.select %19, %17, %16 : vector<256x32xi1>, vector<256x32xf32>
    %c0_13 = arith.constant 0 : index
    %c0_14 = arith.constant 0 : index
    %c0_15 = arith.constant 0 : index
    %21 = vector.load %arg6[%c0_13, %c0_14, %c0_15] : memref<1x256x32xf32, #tpu.memory_space<vmem>>, vector<1x256x32xf32>
    %22 = vector.shape_cast %21 : vector<1x256x32xf32> to vector<256x32xf32>
    %23 = vector.shape_cast %20 : vector<256x32xf32> to vector<1x256x32xf32>
    tpu.vector_store %arg6[%c0_13, %c0_14, %c0_15], %23 {strides = array<i32>} : memref<1x256x32xf32, #tpu.memory_space<vmem>>, vector<1x256x32xf32>,
    %cst_16 = arith.constant 0.000000e+00 : f32
    %24 = vector.broadcast %cst_16 : f32 to vector<256x32xf32>
    %cst_17 = arith.constant 1.000000e+00 : f32
    %25 = vector.broadcast %cst_17 : f32 to vector<256x32xf32>
    %26 = vector.shape_cast %9 : vector<256x1xi1> to vector<256x1xi1>
    %27 = vector.broadcast %26 : vector<256x1xi1> to vector<256x32xi1>
    %28 = arith.select %27, %24, %25 : vector<256x32xi1>, vector<256x32xf32>
    %c0_18 = arith.constant 0 : index
    %c0_19 = arith.constant 0 : index
    %c0_20 = arith.constant 0 : index
    %29 = vector.load %arg7[%c0_18, %c0_19, %c0_20] : memref<1x256x32xf32, #tpu.memory_space<vmem>>, vector<1x256x32xf32>
    %30 = vector.shape_cast %29 : vector<1x256x32xf32> to vector<256x32xf32>
    %31 = vector.shape_cast %28 : vector<256x32xf32> to vector<1x256x32xf32>
    tpu.vector_store %arg7[%c0_18, %c0_19, %c0_20], %31 {strides = array<i32>} : memref<1x256x32xf32, #tpu.memory_space<vmem>>, vector<1x256x32xf32>,
    return
  }
  func.func @transform_0(%arg0: i32, %arg1: i32) -> (i32, i32, i32) {
    %c0_i32 = arith.constant 0 : i32
    %c0_i32_0 = arith.constant 0 : i32
    return %arg0, %arg1, %c0_i32 : i32, i32, i32
  }
  func.func @transform_1(%arg0: i32, %arg1: i32) -> (i32, i32, i32) {
    %c0_i32 = arith.constant 0 : i32
    %c0_i32_0 = arith.constant 0 : i32
    return %arg0, %arg1, %c0_i32 : i32, i32, i32
  }
  func.func @transform_2(%arg0: i32, %arg1: i32) -> (i32, i32) {
    %c0_i32 = arith.constant 0 : i32
    %c0_i32_0 = arith.constant 0 : i32
    %c0_i32_1 = arith.constant 0 : i32
    return %c0_i32, %c0_i32_0 : i32, i32
  }
  func.func @transform_3(%arg0: i32, %arg1: i32) -> (i32, i32) {
    %c0_i32 = arith.constant 0 : i32
    %c0_i32_0 = arith.constant 0 : i32
    %c0_i32_1 = arith.constant 0 : i32
    return %c0_i32, %c0_i32_0 : i32, i32
  }
  func.func @transform_4(%arg0: i32, %arg1: i32) -> (i32, i32, i32) {
    %c0_i32 = arith.constant 0 : i32
    %c0_i32_0 = arith.constant 0 : i32
    return %arg0, %arg1, %c0_i32 : i32, i32, i32
  }
  func.func @transform_5(%arg0: i32, %arg1: i32) -> (i32, i32, i32) {
    %c0_i32 = arith.constant 0 : i32
    %c0_i32_0 = arith.constant 0 : i32
    return %arg0, %arg1, %c0_i32 : i32, i32, i32
  }
}

</mosaic_0001>

<llo_original>
// kernel: _lambda_.1
$region0: #{_lambda_.1}
  #allocation0 [shape = 'u32[]', space=smem, size = 0x4, offset = 0x4, fixed_abs, tag = 'smem constant byte address 0x4 - core index']
  #allocation1 [shape = 'u32[144,128]{1,0:T(1,128)}', space=vmem, size = 0x12000, scoped, tag = 'internal scratch']
  %s0 = inlined_call_operand.vmem [shape: bf16[2,256,36], index: 0, kind: input, shape index: {}]
  %s1 = inlined_call_operand.vmem [shape: f32[2,256,36], index: 1, kind: input, shape index: {}]
  %s2 = inlined_call_operand.vmem [shape: bf16[36,32], index: 2, kind: input, shape index: {}]
  %s3 = inlined_call_operand.vmem [shape: f32[1,32], index: 3, kind: input, shape index: {}]
  %s4 = inlined_call_operand.hbm [shape: f32[2,256,32], index: 4, kind: output, shape index: {0}]
  %s5 = inlined_call_operand.hbm [shape: f32[2,256,32], index: 5, kind: output, shape index: {1}]
  %6 = xla_tuple %s4, %s5
  %s7 = sld [smem:[#allocation0]]
  $region57: #{_lambda_.1} parent=0
    _
  %s9 = ssub.s32 1, %s7
  %s10 = scalar_select 0, %s9, %s7
  $region1: #{_lambda_.1} parent=0
    #allocation2 [shape = 'u8[262144]{0}', space=vmem, size = 0x40000, scoped, tag = 'output window, operand 0']
    #allocation3 [shape = 's32[2]{0}', space=sflag, size = 0x8, scoped, tag = 'scoped memory for _lambda_.1']
    #allocation4 [shape = 'u8[262144]{0}', space=vmem, size = 0x40000, scoped, tag = 'output window, operand 1']
    #allocation5 [shape = 's32[2]{0}', space=sflag, size = 0x8, scoped, tag = 'scoped memory for _lambda_.1']
    %11 = vsyncpa [#allocation3], 0
    %s12 = scalar_lea.sflag [#allocation3], 1
    %13 = vsyncpa %s12, 0
    %14 = vsyncpa [#allocation5], 0
    %s15 = scalar_lea.sflag [#allocation5], 1
    %16 = vsyncpa %s15, 0
    loop: start=0, step=1, limit=4
    $region2: #{_lambda_.1} parent=1 // loop_pre_header
      _
    $region3: #{_lambda_.1} parent=1 // loop_header
      %s18 = sphi 0, %s22
      %p19 = scmp.ge.s32.totalorder %s18, 4
      %s25 = sphi 0, %s37
      %s26 = sphi 0, %s33
      %s27 = sphi 0, %s25
      %s28 = sphi 0, %s26
      %s29 = sphi 0, %s27
      %s30 = sphi 0, %s28
      %s42 = sphi 0, %s44
      %s45 = sphi 0, %s42
      %s46 = sphi 0, %s45
      %s62 = sphi 0, %s46
      %s70 = sphi 0, %s72
      %s73 = sphi 0, %s70
      %s74 = sphi 0, %s73
      %s90 = sphi 0, %s74
      %s94 = sphi 0, %s94
      %s96 = sphi 0, %s94
      %s97 = sphi 0, %s96
      %s111 = sphi 0, %s97
      %s115 = sphi 0, %s115
      %s117 = sphi 0, %s115
      %s118 = sphi 0, %s117
      %s132 = sphi 0, %s118
      %s140 = sphi 0, %s142
      %s143 = sphi 0, %s140
      %s144 = sphi 0, %s143
      %s160 = sphi 0, %s144
      %s168 = sphi 0, %s170
      %s171 = sphi 0, %s168
      %s172 = sphi 0, %s171
      %s188 = sphi 0, %s172
    $region4: #{_lambda_.1} parent=1 // loop_header_branch
      %21 = sbr.rel (%p19) target = $region8
    $region5: #{_lambda_.1} parent=1 // loop_body
      %s23 = ssub.s32 %s18, 1
      %s24 = ssub.s32 %s18, 2
      %s31 = sadd.s32 1, %s26
      %p32 = scmp.ge.s32.totalorder %s31, 1
      %s33 = scalar_select %p32, 0, %s31
      %s34 = sadd.s32 1, %s25
      %s35 = scalar_select %p32, %s34, %s25
      %p36 = scmp.ge.s32.totalorder %s35, 2
      %s37 = scalar_select %p36, 0, %s35
      %s38 = ssub.s32 %s25, %s37
      %s39 = ssub.s32 %s26, %s33
      %s40 = sor.u32 %s38, %s39
      %p41 = scmp.eq.s32.totalorder %s40, 0
      %s43 = sadd.s32 %s42, 1
      %s44 = scalar_select %p41, %s42, %s43
      %p47 = pneg %p41
      %p48 = scmp.eq.s32.totalorder %s18, 1
      %p49 = por %p47, %p48
      %p50 = scmp.ne.s32.totalorder %s42, %s45
      %p51 = scmp.eq.s32.totalorder %s18, 0
      %p52 = por %p50, %p51
      %p53 = scmp.ne.s32.totalorder %s42, %s45
      %p54 = scmp.eq.s32.totalorder %s23, 1
      %p55 = por %p53, %p54
      %p56 = scmp.ne.s32.totalorder %s45, %s46
      %p57 = scmp.eq.s32.totalorder %s23, 0
      %p58 = por %p56, %p57
      %p59 = scmp.ne.s32.totalorder %s45, %s46
      %p60 = scmp.eq.s32.totalorder %s24, 1
      %p61 = por %p59, %p60
      %p63 = scmp.ne.s32.totalorder %s46, %s62
      %p64 = scmp.eq.s32.totalorder %s24, 0
      %p65 = por %p63, %p64
      %s66 = ssub.s32 %s25, %s37
      %s67 = ssub.s32 %s26, %s33
      %s68 = sor.u32 %s66, %s67
      %p69 = scmp.eq.s32.totalorder %s68, 0
      %s71 = sadd.s32 %s70, 1
      %s72 = scalar_select %p69, %s70, %s71
      %p75 = pneg %p69
      %p76 = scmp.eq.s32.totalorder %s18, 1
      %p77 = por %p75, %p76
      %p78 = scmp.ne.s32.totalorder %s70, %s73
      %p79 = scmp.eq.s32.totalorder %s18, 0
      %p80 = por %p78, %p79
      %p81 = scmp.ne.s32.totalorder %s70, %s73
      %p82 = scmp.eq.s32.totalorder %s23, 1
      %p83 = por %p81, %p82
      %p84 = scmp.ne.s32.totalorder %s73, %s74
      %p85 = scmp.eq.s32.totalorder %s23, 0
      %p86 = por %p84, %p85
      %p87 = scmp.ne.s32.totalorder %s73, %s74
      %p88 = scmp.eq.s32.totalorder %s24, 1
      %p89 = por %p87, %p88
      %p91 = scmp.ne.s32.totalorder %s74, %s90
      %p92 = scmp.eq.s32.totalorder %s24, 0
      %p93 = por %p91, %p92
      %s95 = sadd.s32 %s94, 1
      %p98 = scmp.eq.s32.totalorder %s18, 1
      %p99 = scmp.ne.s32.totalorder %s94, %s96
      %p100 = scmp.eq.s32.totalorder %s18, 0
      %p101 = por %p99, %p100
      %p102 = scmp.ne.s32.totalorder %s94, %s96
      %p103 = scmp.eq.s32.totalorder %s23, 1
      %p104 = por %p102, %p103
      %p105 = scmp.ne.s32.totalorder %s96, %s97
      %p106 = scmp.eq.s32.totalorder %s23, 0
      %p107 = por %p105, %p106
      %p108 = scmp.ne.s32.totalorder %s96, %s97
      %p109 = scmp.eq.s32.totalorder %s24, 1
      %p110 = por %p108, %p109
      %p112 = scmp.ne.s32.totalorder %s97, %s111
      %p113 = scmp.eq.s32.totalorder %s24, 0
      %p114 = por %p112, %p113
      %s116 = sadd.s32 %s115, 1
      %p119 = scmp.eq.s32.totalorder %s18, 1
      %p120 = scmp.ne.s32.totalorder %s115, %s117
      %p121 = scmp.eq.s32.totalorder %s18, 0
      %p122 = por %p120, %p121
      %p123 = scmp.ne.s32.totalorder %s115, %s117
      %p124 = scmp.eq.s32.totalorder %s23, 1
      %p125 = por %p123, %p124
      %p126 = scmp.ne.s32.totalorder %s117, %s118
      %p127 = scmp.eq.s32.totalorder %s23, 0
      %p128 = por %p126, %p127
      %p129 = scmp.ne.s32.totalorder %s117, %s118
      %p130 = scmp.eq.s32.totalorder %s24, 1
      %p131 = por %p129, %p130
      %p133 = scmp.ne.s32.totalorder %s118, %s132
      %p134 = scmp.eq.s32.totalorder %s24, 0
      %p135 = por %p133, %p134
      %s136 = ssub.s32 %s25, %s37
      %s137 = ssub.s32 %s26, %s33
      %s138 = sor.u32 %s136, %s137
      %p139 = scmp.eq.s32.totalorder %s138, 0
      %s141 = sadd.s32 %s140, 1
      %s142 = scalar_select %p139, %s140, %s141
      %p145 = pneg %p139
      %p146 = scmp.eq.s32.totalorder %s18, 1
      %p147 = por %p145, %p146
      %p148 = scmp.ne.s32.totalorder %s140, %s143
      %p149 = scmp.eq.s32.totalorder %s18, 0
      %p150 = por %p148, %p149
      %p151 = scmp.ne.s32.totalorder %s140, %s143
      %p152 = scmp.eq.s32.totalorder %s23, 1
      %p153 = por %p151, %p152
      %p154 = scmp.ne.s32.totalorder %s143, %s144
      %p155 = scmp.eq.s32.totalorder %s23, 0
      %p156 = por %p154, %p155
      %p157 = scmp.ne.s32.totalorder %s143, %s144
      %p158 = scmp.eq.s32.totalorder %s24, 1
      %p159 = por %p157, %p158
      %p161 = scmp.ne.s32.totalorder %s144, %s160
      %p162 = scmp.eq.s32.totalorder %s24, 0
      %p163 = por %p161, %p162
      %s164 = ssub.s32 %s25, %s37
      %s165 = ssub.s32 %s26, %s33
      %s166 = sor.u32 %s164, %s165
      %p167 = scmp.eq.s32.totalorder %s166, 0
      %s169 = sadd.s32 %s168, 1
      %s170 = scalar_select %p167, %s168, %s169
      %p173 = pneg %p167
      %p174 = scmp.eq.s32.totalorder %s18, 1
      %p175 = por %p173, %p174
      %p176 = scmp.ne.s32.totalorder %s168, %s171
      %p177 = scmp.eq.s32.totalorder %s18, 0
      %p178 = por %p176, %p177
      %p179 = scmp.ne.s32.totalorder %s168, %s171
      %p180 = scmp.eq.s32.totalorder %s23, 1
      %p181 = por %p179, %p180
      %p182 = scmp.ne.s32.totalorder %s171, %s172
      %p183 = scmp.eq.s32.totalorder %s23, 0
      %p184 = por %p182, %p183
      %p185 = scmp.ne.s32.totalorder %s171, %s172
      %p186 = scmp.eq.s32.totalorder %s24, 1
      %p187 = por %p185, %p186
      %p189 = scmp.ne.s32.totalorder %s172, %s188
      %p190 = scmp.eq.s32.totalorder %s24, 0
      %p191 = por %p189, %p190
      %p192 = scmp.le.s32.totalorder 1, %s18
      %p193 = scmp.lt.s32.totalorder %s18, 3
      %p194 = pnand %p192, %p193
      %p195 = pneg %p194
      // Predicated region
      $region9: #{_lambda_.1} parent=5 // pred_check
        _
      $region10: #{_lambda_.1} parent=5 // pred_check_branch
        %197 = sbr.rel (%p194) target = $region12
      $region11: #{_lambda_.1} parent=5 // pred_region
        %s198 = ssub.s32 %s18, 1
        // Predicated region
        $region13: #{_lambda_.1} parent=11 // pred_check
          %p199 = pneg %p107
        $region14: #{_lambda_.1} parent=11 // pred_check_branch
          %201 = sbr.rel (%p199) target = $region16
        $region15: #{_lambda_.1} parent=11 // pred_region
          _
        $region16: #{_lambda_.1} parent=11 // pred_fallthru
          _
        // Predicated region
        $region17: #{_lambda_.1} parent=11 // pred_check
          %p202 = pneg %p128
        $region18: #{_lambda_.1} parent=11 // pred_check_branch
          %204 = sbr.rel (%p202) target = $region20
        $region19: #{_lambda_.1} parent=11 // pred_region
          _
        $region20: #{_lambda_.1} parent=11 // pred_fallthru
          _
      $region12: #{_lambda_.1} parent=5 // pred_fallthru
        _
      %p205 = scmp.lt.s32.totalorder %s18, 2
      // Predicated region
      $region21: #{_lambda_.1} parent=5 // pred_check
        %p206 = pneg %p205
      $region22: #{_lambda_.1} parent=5 // pred_check_branch
        %208 = sbr.rel (%p206) target = $region24
      $region23: #{_lambda_.1} parent=5 // pred_region
        // Predicated region
        $region25: #{_lambda_.1} parent=23 // pred_check
          %p209 = pneg %p52
        $region26: #{_lambda_.1} parent=23 // pred_check_branch
          %211 = sbr.rel (%p209) target = $region28
        $region27: #{_lambda_.1} parent=23 // pred_region
          %s212 = smul.u32 32, %s26
          %p213 = scmp.lt.s32.totalorder %s25, 1
          %s214 = scalar_select %p213, %s25, 1
          %p215 = scmp.lt.s32.totalorder %s212, 31
          %s216 = scalar_select %p215, %s212, 31
          %s217 = smul.addr %s214, 32
          %s218 = sadd.s32 %s216, %s217
          %s219 = smul.addr %s218, 4
          %s220 = scalar_lea.vmem %s0, %s219
          %s221 = smul.u32 32, %s26
        $region28: #{_lambda_.1} parent=23 // pred_fallthru
          _
        // Predicated region
        $region29: #{_lambda_.1} parent=23 // pred_check
          %p222 = pneg %p80
        $region30: #{_lambda_.1} parent=23 // pred_check_branch
          %224 = sbr.rel (%p222) target = $region32
        $region31: #{_lambda_.1} parent=23 // pred_region
          %s225 = smul.u32 32, %s26
          %p226 = scmp.lt.s32.totalorder %s25, 1
          %s227 = scalar_select %p226, %s25, 1
          %p228 = scmp.lt.s32.totalorder %s225, 31
          %s229 = scalar_select %p228, %s225, 31
          %s230 = smul.addr %s227, 32
          %s231 = sadd.s32 %s229, %s230
          %s232 = smul.addr %s231, 8
          %s233 = scalar_lea.vmem %s1, %s232
          %s234 = smul.u32 32, %s26
        $region32: #{_lambda_.1} parent=23 // pred_fallthru
          _
      $region24: #{_lambda_.1} parent=5 // pred_fallthru
        _
      %p235 = scmp.le.s32.totalorder 1, %s18
      %p236 = scmp.lt.s32.totalorder %s18, 3
      %p237 = pnand %p235, %p236
      %p238 = pneg %p237
      // Predicated region
      $region33: #{_lambda_.1} parent=5 // pred_check
        _
      $region34: #{_lambda_.1} parent=5 // pred_check_branch
        %240 = sbr.rel (%p237) target = $region36
      $region35: #{_lambda_.1} parent=5 // pred_region
        %s241 = ssub.s32 %s18, 1
        %s242 = smul.u32 32, %s28
        %p243 = scmp.lt.s32.totalorder %s27, 1
        %s244 = scalar_select %p243, %s27, 1
        %p245 = scmp.lt.s32.totalorder %s242, 31
        %s246 = scalar_select %p245, %s242, 31
        %s247 = smul.addr %s244, 32
        %s248 = sadd.s32 %s246, %s247
        %s249 = smul.addr %s248, 4
        %s250 = scalar_lea.vmem %s0, %s249
        %p251 = pneg %p58
        %p252 = pneg %p55
        %s253 = smul.u32 32, %s28
        %p254 = scmp.lt.s32.totalorder %s27, 1
        %s255 = scalar_select %p254, %s27, 1
        %p256 = scmp.lt.s32.totalorder %s253, 31
        %s257 = scalar_select %p256, %s253, 31
        %s258 = smul.addr %s255, 32
        %s259 = sadd.s32 %s257, %s258
        %s260 = smul.addr %s259, 8
        %s261 = scalar_lea.vmem %s1, %s260
        %p262 = pneg %p86
        %p263 = pneg %p83
        %p264 = pneg %p107
        %p265 = pneg %p104
        %p266 = pneg %p128
        %p267 = pneg %p125
        %p268 = pneg %p156
        %p269 = pneg %p153
        %s270 = sand.u32 %s143, 1
        %s271 = scalar_lea.sflag [#allocation3], %s270
        %s272 = sand.u32 %s143, 1
        %s273 = smul.addr %s272, 256
        %s274 = scalar_lea.vmem [#allocation2], %s273
        %p275 = pneg %p184
        %p276 = pneg %p181
        %s277 = sand.u32 %s171, 1
        %s278 = scalar_lea.sflag [#allocation5], %s277
        %s279 = sand.u32 %s171, 1
        %s280 = smul.addr %s279, 256
        %s281 = scalar_lea.vmem [#allocation4], %s280
        %s282 = smul.u32 32, %s28
        %p283 = scmp.lt.s32.totalorder %s27, 1
        %s284 = scalar_select %p283, %s27, 1
        %p285 = scmp.lt.s32.totalorder %s282, 31
        %s286 = scalar_select %p285, %s282, 31
        %s287 = smul.addr %s284, 32
        %s288 = sadd.s32 %s286, %s287
        %s289 = smul.addr %s288, 4
        %s290 = scalar_lea.vmem %s0, %s289
        %s291 = smul.u32 32, %s28
        %s292 = smul.u32 32, %s28
        %p293 = scmp.lt.s32.totalorder %s27, 1
        %s294 = scalar_select %p293, %s27, 1
        %p295 = scmp.lt.s32.totalorder %s292, 31
        %s296 = scalar_select %p295, %s292, 31
        %s297 = smul.addr %s294, 32
        %s298 = sadd.s32 %s296, %s297
        %s299 = smul.addr %s298, 8
        %s300 = scalar_lea.vmem %s1, %s299
        %s301 = smul.u32 32, %s28
        %s302 = smul.u32 32, %s28
        %s303 = smul.u32 32, %s28
        %v305 = vld [vmem:[%s290] sm:$0xf]
        %v306 = vld [vmem:[%s290 + $0x4] sm:$0xf]
        %v307 = vld [vmem:[%s290 + $0x8] sm:$0xf]
        %v308 = vld [vmem:[%s290 + $0xc] sm:$0xf]
        %v309 = vld [vmem:[%s290 + $0x10] sm:$0xf]
        %v310 = vld [vmem:[%s290 + $0x14] sm:$0xf]
        %v311 = vld [vmem:[%s290 + $0x18] sm:$0xf]
        %v312 = vld [vmem:[%s290 + $0x1c] sm:$0xf]
        %v313 = vld [vmem:[%s290 + $0x20] sm:$0xf]
        %v314 = vld [vmem:[%s290 + $0x24] sm:$0xf]
        %v315 = vld [vmem:[%s290 + $0x28] sm:$0xf]
        %v316 = vld [vmem:[%s290 + $0x2c] sm:$0xf]
        %v317 = vld [vmem:[%s290 + $0x30] sm:$0xf]
        %v318 = vld [vmem:[%s290 + $0x34] sm:$0xf]
        %v319 = vld [vmem:[%s290 + $0x38] sm:$0xf]
        %v320 = vld [vmem:[%s290 + $0x3c] sm:$0xf]
        %v321 = vld [vmem:[%s290 + $0x40] sm:$0xf]
        %v322 = vld [vmem:[%s290 + $0x44] sm:$0xf]
        %v323 = vld [vmem:[%s290 + $0x48] sm:$0xf]
        %v324 = vld [vmem:[%s290 + $0x4c] sm:$0xf]
        %v325 = vld [vmem:[%s290 + $0x50] sm:$0xf]
        %v326 = vld [vmem:[%s290 + $0x54] sm:$0xf]
        %v327 = vld [vmem:[%s290 + $0x58] sm:$0xf]
        %v328 = vld [vmem:[%s290 + $0x5c] sm:$0xf]
        %v329 = vld [vmem:[%s290 + $0x60] sm:$0xf]
        %v330 = vld [vmem:[%s290 + $0x64] sm:$0xf]
        %v331 = vld [vmem:[%s290 + $0x68] sm:$0xf]
        %v332 = vld [vmem:[%s290 + $0x6c] sm:$0xf]
        %v333 = vld [vmem:[%s290 + $0x70] sm:$0xf]
        %v334 = vld [vmem:[%s290 + $0x74] sm:$0xf]
        %v335 = vld [vmem:[%s290 + $0x78] sm:$0xf]
        %v336 = vld [vmem:[%s290 + $0x7c] sm:$0xf]
        %v337 = vld [vmem:[%s2] sm:$0xf]
        %v338 = vld [vmem:[%s2 + $0x4] sm:$0xf]
        %v339 = vld [vmem:[%s2 + $0x8] sm:$0xf]
        %v340 = vld [vmem:[%s2 + $0xc] sm:$0xf]
        %v341 = vld [vmem:[%s2 + $0x10] sm:$0x3]
        %v374 = vunpack.c.l.b16 %v305
        %v375 = vunpack.c.l.b16 %v306
        %v376 = vunpack.c.l.b16 %v307
        %v377 = vunpack.c.l.b16 %v308
        %v378 = vunpack.c.l.b16 %v309
        %v379 = vunpack.c.l.b16 %v310
        %v380 = vunpack.c.l.b16 %v311
        %v381 = vunpack.c.l.b16 %v312
        %v382 = vunpack.c.l.b16 %v313
        %v383 = vunpack.c.l.b16 %v314
        %v384 = vunpack.c.l.b16 %v315
        %v385 = vunpack.c.l.b16 %v316
        %v386 = vunpack.c.l.b16 %v317
        %v387 = vunpack.c.l.b16 %v318
        %v388 = vunpack.c.l.b16 %v319
        %v389 = vunpack.c.l.b16 %v320
        %v390 = vunpack.c.l.b16 %v321
        %v391 = vunpack.c.l.b16 %v322
        %v392 = vunpack.c.l.b16 %v323
        %v393 = vunpack.c.l.b16 %v324
        %v394 = vunpack.c.l.b16 %v325
        %v395 = vunpack.c.l.b16 %v326
        %v396 = vunpack.c.l.b16 %v327
        %v397 = vunpack.c.l.b16 %v328
        %v398 = vunpack.c.l.b16 %v329
        %v399 = vunpack.c.l.b16 %v330
        %v400 = vunpack.c.l.b16 %v331
        %v401 = vunpack.c.l.b16 %v332
        %v402 = vunpack.c.l.b16 %v333
        %v403 = vunpack.c.l.b16 %v334
        %v404 = vunpack.c.l.b16 %v335
        %v405 = vunpack.c.l.b16 %v336
        %v406 = vpack.c.b16 %v375, %v374
        %v407 = vpack.c.b16 %v377, %v376
        %v408 = vpack.c.b16 %v379, %v378
        %v409 = vpack.c.b16 %v381, %v380
        %v410 = vpack.c.b16 %v383, %v382
        %v411 = vpack.c.b16 %v385, %v384
        %v412 = vpack.c.b16 %v387, %v386
        %v413 = vpack.c.b16 %v389, %v388
        %v414 = vpack.c.b16 %v391, %v390
        %v415 = vpack.c.b16 %v393, %v392
        %v416 = vpack.c.b16 %v395, %v394
        %v417 = vpack.c.b16 %v397, %v396
        %v418 = vpack.c.b16 %v399, %v398
        %v419 = vpack.c.b16 %v401, %v400
        %v420 = vpack.c.b16 %v403, %v402
        %v421 = vpack.c.b16 %v405, %v404
        %v427 = vunpack.c.l.b16 %v337
        %v428 = vunpack.c.l.b16 %v338
        %v429 = vunpack.c.l.b16 %v339
        %v430 = vunpack.c.l.b16 %v340
        %v431 = vunpack.c.l.b16 %v341
        %v432 = vpack.c.b16 %v428, %v427
        %v433 = vpack.c.b16 %v430, %v429
        %v434 = vpack.c.b16 %v431, %v431
        %vm437 = vcmask 293888
        %v439 = vsel %vm437, %v406, 0
        %v442 = vsel %vm437, %v407, 0
        %v445 = vsel %vm437, %v408, 0
        %v448 = vsel %vm437, %v409, 0
        %v451 = vsel %vm437, %v410, 0
        %v454 = vsel %vm437, %v411, 0
        %v457 = vsel %vm437, %v412, 0
        %v460 = vsel %vm437, %v413, 0
        %v463 = vsel %vm437, %v414, 0
        %v466 = vsel %vm437, %v415, 0
        %v469 = vsel %vm437, %v416, 0
        %v472 = vsel %vm437, %v417, 0
        %v475 = vsel %vm437, %v418, 0
        %v478 = vsel %vm437, %v419, 0
        %v481 = vsel %vm437, %v420, 0
        %v484 = vsel %vm437, %v421, 0
        %vm486 = vcmask 1041408
        %v488 = vsel %vm486, %v434, 0
        %490 = vmatprep.subr.bf16.mxu0 0
        %491 = vmatpush1.bf16.msra.mxu0 %v432
        %492 = vmatprep.subr.bf16.mxu0 0
        %493 = vmatpush1.bf16.msra.mxu0 %v433
        %494 = vmatprep.subr.bf16.mxu0 0
        %495 = vmatpush1.bf16.msra.mxu0 %v488
        %496 = vmatprep.subr.bf16.mxu0 0
        %497 = vmatpush1.bf16.msra.mxu0 0
        %498 = vmatprep.subr.bf16.mxu0 0
        %499 = vmatpush1.bf16.msra.mxu0 0
        %500 = vmatprep.subr.bf16.mxu0 0
        %501 = vmatpush1.bf16.msra.mxu0 0
        %502 = vmatprep.subr.bf16.mxu0 0
        %503 = vmatpush1.bf16.msra.mxu0 0
        %504 = vmatprep.subr.bf16.mxu0 0
        %505 = vmatpush1.bf16.msra.mxu0 0
        %506 = vmatprep.subr.bf16.mxu0 0
        %507 = vmatpush1.bf16.msra.mxu0 0
        %508 = vmatprep.subr.bf16.mxu0 0
        %509 = vmatpush1.bf16.msra.mxu0 0
        %510 = vmatprep.subr.bf16.mxu0 0
        %511 = vmatpush1.bf16.msra.mxu0 0
        %512 = vmatprep.subr.bf16.mxu0 0
        %513 = vmatpush1.bf16.msra.mxu0 0
        %514 = vmatprep.subr.bf16.mxu0 0
        %515 = vmatpush1.bf16.msra.mxu0 0
        %516 = vmatprep.subr.bf16.mxu0 0
        %517 = vmatpush1.bf16.msra.mxu0 0
        %518 = vmatprep.subr.bf16.mxu0 0
        %519 = vmatpush1.bf16.msra.mxu0 0
        %520 = vmatprep.subr.bf16.mxu0 0
        %521 = vmatpush1.bf16.msra.mxu0 0
        %522 = vmatprep.mubr.bf16.mxu0 0
        %523 = vmatmul.mubr.bf16.gmra.mrb[0].mxu0 %v439
        %v524 = vpop.f32.mrb[0].mxu0
        %v525 = vadd.f32 0.0, %v524
        %v526 = vpop.f32.mrb[0].mxu0
        %v527 = vpop.f32.mrb[0].mxu0
        %v528 = vadd.f32 0.0, %v527
        %v529 = vpop.f32.mrb[0].mxu0
        %530 = vmatprep.mubr.bf16.mxu0 0
        %531 = vmatmul.mubr.bf16.gmra.mrb[0].mxu0 %v442
        %v532 = vpop.f32.mrb[0].mxu0
        %v533 = vadd.f32 0.0, %v532
        %v534 = vpop.f32.mrb[0].mxu0
        %v535 = vpop.f32.mrb[0].mxu0
        %v536 = vadd.f32 0.0, %v535
        %v537 = vpop.f32.mrb[0].mxu0
        %538 = vmatprep.mubr.bf16.mxu0 0
        %539 = vmatmul.mubr.bf16.gmra.mrb[0].mxu0 %v445
        %v540 = vpop.f32.mrb[0].mxu0
        %v541 = vadd.f32 0.0, %v540
        %v542 = vpop.f32.mrb[0].mxu0
        %v543 = vpop.f32.mrb[0].mxu0
        %v544 = vadd.f32 0.0, %v543
        %v545 = vpop.f32.mrb[0].mxu0
        %546 = vmatprep.mubr.bf16.mxu0 0
        %547 = vmatmul.mubr.bf16.gmra.mrb[0].mxu0 %v448
        %v548 = vpop.f32.mrb[0].mxu0
        %v549 = vadd.f32 0.0, %v548
        %v550 = vpop.f32.mrb[0].mxu0
        %v551 = vpop.f32.mrb[0].mxu0
        %v552 = vadd.f32 0.0, %v551
        %v553 = vpop.f32.mrb[0].mxu0
        %554 = vmatprep.mubr.bf16.mxu0 0
        %555 = vmatmul.mubr.bf16.gmra.mrb[0].mxu0 %v451
        %v556 = vpop.f32.mrb[0].mxu0
        %v557 = vadd.f32 0.0, %v556
        %v558 = vpop.f32.mrb[0].mxu0
        %v559 = vpop.f32.mrb[0].mxu0
        %v560 = vadd.f32 0.0, %v559
        %v561 = vpop.f32.mrb[0].mxu0
        %562 = vmatprep.mubr.bf16.mxu0 0
        %563 = vmatmul.mubr.bf16.gmra.mrb[0].mxu0 %v454
        %v564 = vpop.f32.mrb[0].mxu0
        %v565 = vadd.f32 0.0, %v564
        %v566 = vpop.f32.mrb[0].mxu0
        %v567 = vpop.f32.mrb[0].mxu0
        %v568 = vadd.f32 0.0, %v567
        %v569 = vpop.f32.mrb[0].mxu0
        %570 = vmatprep.mubr.bf16.mxu0 0
        %571 = vmatmul.mubr.bf16.gmra.mrb[0].mxu0 %v457
        %v572 = vpop.f32.mrb[0].mxu0
        %v573 = vadd.f32 0.0, %v572
        %v574 = vpop.f32.mrb[0].mxu0
        %v575 = vpop.f32.mrb[0].mxu0
        %v576 = vadd.f32 0.0, %v575
        %v577 = vpop.f32.mrb[0].mxu0
        %578 = vmatprep.mubr.bf16.mxu0 0
        %579 = vmatmul.mubr.bf16.gmra.mrb[0].mxu0 %v460
        %v580 = vpop.f32.mrb[0].mxu0
        %v581 = vadd.f32 0.0, %v580
        %v582 = vpop.f32.mrb[0].mxu0
        %v583 = vpop.f32.mrb[0].mxu0
        %v584 = vadd.f32 0.0, %v583
        %v585 = vpop.f32.mrb[0].mxu0
        %586 = vmatprep.mubr.bf16.mxu0 0
        %587 = vmatmul.mubr.bf16.gmra.mrb[0].mxu0 %v463
        %v588 = vpop.f32.mrb[0].mxu0
        %v589 = vadd.f32 0.0, %v588
        %v590 = vpop.f32.mrb[0].mxu0
        %v591 = vpop.f32.mrb[0].mxu0
        %v592 = vadd.f32 0.0, %v591
        %v593 = vpop.f32.mrb[0].mxu0
        %594 = vmatprep.mubr.bf16.mxu0 0
        %595 = vmatmul.mubr.bf16.gmra.mrb[0].mxu0 %v466
        %v596 = vpop.f32.mrb[0].mxu0
        %v597 = vadd.f32 0.0, %v596
        %v598 = vpop.f32.mrb[0].mxu0
        %v599 = vpop.f32.mrb[0].mxu0
        %v600 = vadd.f32 0.0, %v599
        %v601 = vpop.f32.mrb[0].mxu0
        %602 = vmatprep.mubr.bf16.mxu0 0
        %603 = vmatmul.mubr.bf16.gmra.mrb[0].mxu0 %v469
        %v604 = vpop.f32.mrb[0].mxu0
        %v605 = vadd.f32 0.0, %v604
        %v606 = vpop.f32.mrb[0].mxu0
        %v607 = vpop.f32.mrb[0].mxu0
        %v608 = vadd.f32 0.0, %v607
        %v609 = vpop.f32.mrb[0].mxu0
        %610 = vmatprep.mubr.bf16.mxu0 0
        %611 = vmatmul.mubr.bf16.gmra.mrb[0].mxu0 %v472
        %v612 = vpop.f32.mrb[0].mxu0
        %v613 = vadd.f32 0.0, %v612
        %v614 = vpop.f32.mrb[0].mxu0
        %v615 = vpop.f32.mrb[0].mxu0
        %v616 = vadd.f32 0.0, %v615
        %v617 = vpop.f32.mrb[0].mxu0
        %618 = vmatprep.mubr.bf16.mxu0 0
        %619 = vmatmul.mubr.bf16.gmra.mrb[0].mxu0 %v475
        %v620 = vpop.f32.mrb[0].mxu0
        %v621 = vadd.f32 0.0, %v620
        %v622 = vpop.f32.mrb[0].mxu0
        %v623 = vpop.f32.mrb[0].mxu0
        %v624 = vadd.f32 0.0, %v623
        %v625 = vpop.f32.mrb[0].mxu0
        %626 = vmatprep.mubr.bf16.mxu0 0
        %627 = vmatmul.mubr.bf16.gmra.mrb[0].mxu0 %v478
        %v628 = vpop.f32.mrb[0].mxu0
        %v629 = vadd.f32 0.0, %v628
        %v630 = vpop.f32.mrb[0].mxu0
        %v631 = vpop.f32.mrb[0].mxu0
        %v632 = vadd.f32 0.0, %v631
        %v633 = vpop.f32.mrb[0].mxu0
        %634 = vmatprep.mubr.bf16.mxu0 0
        %635 = vmatmul.mubr.bf16.gmra.mrb[0].mxu0 %v481
        %v636 = vpop.f32.mrb[0].mxu0
        %v637 = vadd.f32 0.0, %v636
        %v638 = vpop.f32.mrb[0].mxu0
        %v639 = vpop.f32.mrb[0].mxu0
        %v640 = vadd.f32 0.0, %v639
        %v641 = vpop.f32.mrb[0].mxu0
        %642 = vmatprep.mubr.bf16.mxu0 0
        %643 = vmatmul.mubr.bf16.gmra.mrb[0].mxu0 %v484
        %v644 = vpop.f32.mrb[0].mxu0
        %v645 = vadd.f32 0.0, %v644
        %v646 = vpop.f32.mrb[0].mxu0
        %v647 = vpop.f32.mrb[0].mxu0
        %v648 = vadd.f32 0.0, %v647
        %v649 = vpop.f32.mrb[0].mxu0
        %650 = vdwg.mxu0
        %v651 = vld [vmem:[%s300] sm:$0xff]
        %v652 = vld [vmem:[%s300 + $0x8] sm:$0xff]
        %v653 = vld [vmem:[%s300 + $0x10] sm:$0xff]
        %v654 = vld [vmem:[%s300 + $0x18] sm:$0xff]
        %v655 = vld [vmem:[%s300 + $0x20] sm:$0xff]
        %v656 = vld [vmem:[%s300 + $0x28] sm:$0xff]
        %v657 = vld [vmem:[%s300 + $0x30] sm:$0xff]
        %v658 = vld [vmem:[%s300 + $0x38] sm:$0xff]
        %v659 = vld [vmem:[%s300 + $0x40] sm:$0xff]
        %v660 = vld [vmem:[%s300 + $0x48] sm:$0xff]
        %v661 = vld [vmem:[%s300 + $0x50] sm:$0xff]
        %v662 = vld [vmem:[%s300 + $0x58] sm:$0xff]
        %v663 = vld [vmem:[%s300 + $0x60] sm:$0xff]
        %v664 = vld [vmem:[%s300 + $0x68] sm:$0xff]
        %v665 = vld [vmem:[%s300 + $0x70] sm:$0xff]
        %v666 = vld [vmem:[%s300 + $0x78] sm:$0xff]
        %v667 = vld [vmem:[%s300 + $0x80] sm:$0xff]
        %v668 = vld [vmem:[%s300 + $0x88] sm:$0xff]
        %v669 = vld [vmem:[%s300 + $0x90] sm:$0xff]
        %v670 = vld [vmem:[%s300 + $0x98] sm:$0xff]
        %v671 = vld [vmem:[%s300 + $0xa0] sm:$0xff]
        %v672 = vld [vmem:[%s300 + $0xa8] sm:$0xff]
        %v673 = vld [vmem:[%s300 + $0xb0] sm:$0xff]
        %v674 = vld [vmem:[%s300 + $0xb8] sm:$0xff]
        %v675 = vld [vmem:[%s300 + $0xc0] sm:$0xff]
        %v676 = vld [vmem:[%s300 + $0xc8] sm:$0xff]
        %v677 = vld [vmem:[%s300 + $0xd0] sm:$0xff]
        %v678 = vld [vmem:[%s300 + $0xd8] sm:$0xff]
        %v679 = vld [vmem:[%s300 + $0xe0] sm:$0xff]
        %v680 = vld [vmem:[%s300 + $0xe8] sm:$0xff]
        %v681 = vld [vmem:[%s300 + $0xf0] sm:$0xff]
        %v682 = vld [vmem:[%s300 + $0xf8] sm:$0xff]
        %v683 = vsel %vm437, %v651, 0.0
        %684 = vadd.xlane.f32.xlu0 %v683
        %v685 = vpop.xlane.xlu0 %684
        %v686 = vsel %vm437, %v652, 0.0
        %687 = vadd.xlane.f32.xlu0 %v686
        %v688 = vpop.xlane.xlu0 %687
        %v689 = vsel %vm437, %v653, 0.0
        %690 = vadd.xlane.f32.xlu0 %v689
        %v691 = vpop.xlane.xlu0 %690
        %v692 = vsel %vm437, %v654, 0.0
        %693 = vadd.xlane.f32.xlu0 %v692
        %v694 = vpop.xlane.xlu0 %693
        %v695 = vsel %vm437, %v655, 0.0
        %696 = vadd.xlane.f32.xlu0 %v695
        %v697 = vpop.xlane.xlu0 %696
        %v698 = vsel %vm437, %v656, 0.0
        %699 = vadd.xlane.f32.xlu0 %v698
        %v700 = vpop.xlane.xlu0 %699
        %v701 = vsel %vm437, %v657, 0.0
        %702 = vadd.xlane.f32.xlu0 %v701
        %v703 = vpop.xlane.xlu0 %702
        %v704 = vsel %vm437, %v658, 0.0
        %705 = vadd.xlane.f32.xlu0 %v704
        %v706 = vpop.xlane.xlu0 %705
        %v707 = vsel %vm437, %v659, 0.0
        %708 = vadd.xlane.f32.xlu0 %v707
        %v709 = vpop.xlane.xlu0 %708
        %v710 = vsel %vm437, %v660, 0.0
        %711 = vadd.xlane.f32.xlu0 %v710
        %v712 = vpop.xlane.xlu0 %711
        %v713 = vsel %vm437, %v661, 0.0
        %714 = vadd.xlane.f32.xlu0 %v713
        %v715 = vpop.xlane.xlu0 %714
        %v716 = vsel %vm437, %v662, 0.0
        %717 = vadd.xlane.f32.xlu0 %v716
        %v718 = vpop.xlane.xlu0 %717
        %v719 = vsel %vm437, %v663, 0.0
        %720 = vadd.xlane.f32.xlu0 %v719
        %v721 = vpop.xlane.xlu0 %720
        %v722 = vsel %vm437, %v664, 0.0
        %723 = vadd.xlane.f32.xlu0 %v722
        %v724 = vpop.xlane.xlu0 %723
        %v725 = vsel %vm437, %v665, 0.0
        %726 = vadd.xlane.f32.xlu0 %v725
        %v727 = vpop.xlane.xlu0 %726
        %v728 = vsel %vm437, %v666, 0.0
        %729 = vadd.xlane.f32.xlu0 %v728
        %v730 = vpop.xlane.xlu0 %729
        %v731 = vsel %vm437, %v667, 0.0
        %732 = vadd.xlane.f32.xlu0 %v731
        %v733 = vpop.xlane.xlu0 %732
        %v734 = vsel %vm437, %v668, 0.0
        %735 = vadd.xlane.f32.xlu0 %v734
        %v736 = vpop.xlane.xlu0 %735
        %v737 = vsel %vm437, %v669, 0.0
        %738 = vadd.xlane.f32.xlu0 %v737
        %v739 = vpop.xlane.xlu0 %738
        %v740 = vsel %vm437, %v670, 0.0
        %741 = vadd.xlane.f32.xlu0 %v740
        %v742 = vpop.xlane.xlu0 %741
        %v743 = vsel %vm437, %v671, 0.0
        %744 = vadd.xlane.f32.xlu0 %v743
        %v745 = vpop.xlane.xlu0 %744
        %v746 = vsel %vm437, %v672, 0.0
        %747 = vadd.xlane.f32.xlu0 %v746
        %v748 = vpop.xlane.xlu0 %747
        %v749 = vsel %vm437, %v673, 0.0
        %750 = vadd.xlane.f32.xlu0 %v749
        %v751 = vpop.xlane.xlu0 %750
        %v752 = vsel %vm437, %v674, 0.0
        %753 = vadd.xlane.f32.xlu0 %v752
        %v754 = vpop.xlane.xlu0 %753
        %v755 = vsel %vm437, %v675, 0.0
        %756 = vadd.xlane.f32.xlu0 %v755
        %v757 = vpop.xlane.xlu0 %756
        %v758 = vsel %vm437, %v676, 0.0
        %759 = vadd.xlane.f32.xlu0 %v758
        %v760 = vpop.xlane.xlu0 %759
        %v761 = vsel %vm437, %v677, 0.0
        %762 = vadd.xlane.f32.xlu0 %v761
        %v763 = vpop.xlane.xlu0 %762
        %v764 = vsel %vm437, %v678, 0.0
        %765 = vadd.xlane.f32.xlu0 %v764
        %v766 = vpop.xlane.xlu0 %765
        %v767 = vsel %vm437, %v679, 0.0
        %768 = vadd.xlane.f32.xlu0 %v767
        %v769 = vpop.xlane.xlu0 %768
        %v770 = vsel %vm437, %v680, 0.0
        %771 = vadd.xlane.f32.xlu0 %v770
        %v772 = vpop.xlane.xlu0 %771
        %v773 = vsel %vm437, %v681, 0.0
        %774 = vadd.xlane.f32.xlu0 %v773
        %v775 = vpop.xlane.xlu0 %774
        %v776 = vsel %vm437, %v682, 0.0
        %777 = vadd.xlane.f32.xlu0 %v776
        %v778 = vpop.xlane.xlu0 %777
        %vm779 = vcmp.eq.f32.partialorder %v685, 0.0
        %vm780 = vcmp.eq.f32.partialorder %v688, 0.0
        %vm781 = vcmp.eq.f32.partialorder %v691, 0.0
        %vm782 = vcmp.eq.f32.partialorder %v694, 0.0
        %vm783 = vcmp.eq.f32.partialorder %v697, 0.0
        %vm784 = vcmp.eq.f32.partialorder %v700, 0.0
        %vm785 = vcmp.eq.f32.partialorder %v703, 0.0
        %vm786 = vcmp.eq.f32.partialorder %v706, 0.0
        %vm787 = vcmp.eq.f32.partialorder %v709, 0.0
        %vm788 = vcmp.eq.f32.partialorder %v712, 0.0
        %vm789 = vcmp.eq.f32.partialorder %v715, 0.0
        %vm790 = vcmp.eq.f32.partialorder %v718, 0.0
        %vm791 = vcmp.eq.f32.partialorder %v721, 0.0
        %vm792 = vcmp.eq.f32.partialorder %v724, 0.0
        %vm793 = vcmp.eq.f32.partialorder %v727, 0.0
        %vm794 = vcmp.eq.f32.partialorder %v730, 0.0
        %vm795 = vcmp.eq.f32.partialorder %v733, 0.0
        %vm796 = vcmp.eq.f32.partialorder %v736, 0.0
        %vm797 = vcmp.eq.f32.partialorder %v739, 0.0
        %vm798 = vcmp.eq.f32.partialorder %v742, 0.0
        %vm799 = vcmp.eq.f32.partialorder %v745, 0.0
        %vm800 = vcmp.eq.f32.partialorder %v748, 0.0
        %vm801 = vcmp.eq.f32.partialorder %v751, 0.0
        %vm802 = vcmp.eq.f32.partialorder %v754, 0.0
        %vm803 = vcmp.eq.f32.partialorder %v757, 0.0
        %vm804 = vcmp.eq.f32.partialorder %v760, 0.0
        %vm805 = vcmp.eq.f32.partialorder %v763, 0.0
        %vm806 = vcmp.eq.f32.partialorder %v766, 0.0
        %vm807 = vcmp.eq.f32.partialorder %v769, 0.0
        %vm808 = vcmp.eq.f32.partialorder %v772, 0.0
        %vm809 = vcmp.eq.f32.partialorder %v775, 0.0
        %vm810 = vcmp.eq.f32.partialorder %v778, 0.0
        %v811 = vsel %vm779, 1.0, %v685
        %v812 = vsel %vm780, 1.0, %v688
        %v813 = vsel %vm781, 1.0, %v691
        %v814 = vsel %vm782, 1.0, %v694
        %v815 = vsel %vm783, 1.0, %v697
        %v816 = vsel %vm784, 1.0, %v700
        %v817 = vsel %vm785, 1.0, %v703
        %v818 = vsel %vm786, 1.0, %v706
        %v819 = vsel %vm787, 1.0, %v709
        %v820 = vsel %vm788, 1.0, %v712
        %v821 = vsel %vm789, 1.0, %v715
        %v822 = vsel %vm790, 1.0, %v718
        %v823 = vsel %vm791, 1.0, %v721
        %v824 = vsel %vm792, 1.0, %v724
        %v825 = vsel %vm793, 1.0, %v727
        %v826 = vsel %vm794, 1.0, %v730
        %v827 = vsel %vm795, 1.0, %v733
        %v828 = vsel %vm796, 1.0, %v736
        %v829 = vsel %vm797, 1.0, %v739
        %v830 = vsel %vm798, 1.0, %v742
        %v831 = vsel %vm799, 1.0, %v745
        %v832 = vsel %vm800, 1.0, %v748
        %v833 = vsel %vm801, 1.0, %v751
        %v834 = vsel %vm802, 1.0, %v754
        %v835 = vsel %vm803, 1.0, %v757
        %v836 = vsel %vm804, 1.0, %v760
        %v837 = vsel %vm805, 1.0, %v763
        %v838 = vsel %vm806, 1.0, %v766
        %v839 = vsel %vm807, 1.0, %v769
        %v840 = vsel %vm808, 1.0, %v772
        %v841 = vsel %vm809, 1.0, %v775
        %v842 = vsel %vm810, 1.0, %v778
        %v843 = vrcp.pop %v811
        %v844 = vmul.f32 %v525, %v843
        %v845 = vrcp.pop %v812
        %v846 = vmul.f32 %v528, %v845
        %v847 = vrcp.pop %v813
        %v848 = vmul.f32 %v533, %v847
        %v849 = vrcp.pop %v814
        %v850 = vmul.f32 %v536, %v849
        %v851 = vrcp.pop %v815
        %v852 = vmul.f32 %v541, %v851
        %v853 = vrcp.pop %v816
        %v854 = vmul.f32 %v544, %v853
        %v855 = vrcp.pop %v817
        %v856 = vmul.f32 %v549, %v855
        %v857 = vrcp.pop %v818
        %v858 = vmul.f32 %v552, %v857
        %v859 = vrcp.pop %v819
        %v860 = vmul.f32 %v557, %v859
        %v861 = vrcp.pop %v820
        %v862 = vmul.f32 %v560, %v861
        %v863 = vrcp.pop %v821
        %v864 = vmul.f32 %v565, %v863
        %v865 = vrcp.pop %v822
        %v866 = vmul.f32 %v568, %v865
        %v867 = vrcp.pop %v823
        %v868 = vmul.f32 %v573, %v867
        %v869 = vrcp.pop %v824
        %v870 = vmul.f32 %v576, %v869
        %v871 = vrcp.pop %v825
        %v872 = vmul.f32 %v581, %v871
        %v873 = vrcp.pop %v826
        %v874 = vmul.f32 %v584, %v873
        %v875 = vrcp.pop %v827
        %v876 = vmul.f32 %v589, %v875
        %v877 = vrcp.pop %v828
        %v878 = vmul.f32 %v592, %v877
        %v879 = vrcp.pop %v829
        %v880 = vmul.f32 %v597, %v879
        %v881 = vrcp.pop %v830
        %v882 = vmul.f32 %v600, %v881
        %v883 = vrcp.pop %v831
        %v884 = vmul.f32 %v605, %v883
        %v885 = vrcp.pop %v832
        %v886 = vmul.f32 %v608, %v885
        %v887 = vrcp.pop %v833
        %v888 = vmul.f32 %v613, %v887
        %v889 = vrcp.pop %v834
        %v890 = vmul.f32 %v616, %v889
        %v891 = vrcp.pop %v835
        %v892 = vmul.f32 %v621, %v891
        %v893 = vrcp.pop %v836
        %v894 = vmul.f32 %v624, %v893
        %v895 = vrcp.pop %v837
        %v896 = vmul.f32 %v629, %v895
        %v897 = vrcp.pop %v838
        %v898 = vmul.f32 %v632, %v897
        %v899 = vrcp.pop %v839
        %v900 = vmul.f32 %v637, %v899
        %v901 = vrcp.pop %v840
        %v902 = vmul.f32 %v640, %v901
        %v903 = vrcp.pop %v841
        %v904 = vmul.f32 %v645, %v903
        %v905 = vrcp.pop %v842
        %v906 = vmul.f32 %v648, %v905
        %v907 = vld [vmem:[%s3] sm:$0x1]
        %v909 = vlaneseq
        %v910 = vshrl.u32 %v909, 7
        %v911 = vsub.s32 0, %v910
        %v912 = vrot.slane %v907, %v911
        %v914 = vadd.f32 %v844, %v912
        %v915 = vadd.f32 %v846, %v912
        %v916 = vadd.f32 %v848, %v912
        %v917 = vadd.f32 %v850, %v912
        %v918 = vadd.f32 %v852, %v912
        %v919 = vadd.f32 %v854, %v912
        %v920 = vadd.f32 %v856, %v912
        %v921 = vadd.f32 %v858, %v912
        %v922 = vadd.f32 %v860, %v912
        %v923 = vadd.f32 %v862, %v912
        %v924 = vadd.f32 %v864, %v912
        %v925 = vadd.f32 %v866, %v912
        %v926 = vadd.f32 %v868, %v912
        %v927 = vadd.f32 %v870, %v912
        %v928 = vadd.f32 %v872, %v912
        %v929 = vadd.f32 %v874, %v912
        %v930 = vadd.f32 %v876, %v912
        %v931 = vadd.f32 %v878, %v912
        %v932 = vadd.f32 %v880, %v912
        %v933 = vadd.f32 %v882, %v912
        %v934 = vadd.f32 %v884, %v912
        %v935 = vadd.f32 %v886, %v912
        %v936 = vadd.f32 %v888, %v912
        %v937 = vadd.f32 %v890, %v912
        %v938 = vadd.f32 %v892, %v912
        %v939 = vadd.f32 %v894, %v912
        %v940 = vadd.f32 %v896, %v912
        %v941 = vadd.f32 %v898, %v912
        %v942 = vadd.f32 %v900, %v912
        %v943 = vadd.f32 %v902, %v912
        %v944 = vadd.f32 %v904, %v912
        %v945 = vadd.f32 %v906, %v912
        %v946 = vsel %vm779, 1, 0
        %v947 = vsel %vm780, 1, 0
        %v948 = vsel %vm781, 1, 0
        %v949 = vsel %vm782, 1, 0
        %v950 = vsel %vm783, 1, 0
        %v951 = vsel %vm784, 1, 0
        %v952 = vsel %vm785, 1, 0
        %v953 = vsel %vm786, 1, 0
        %v954 = vsel %vm787, 1, 0
        %v955 = vsel %vm788, 1, 0
        %v956 = vsel %vm789, 1, 0
        %v957 = vsel %vm790, 1, 0
        %v958 = vsel %vm791, 1, 0
        %v959 = vsel %vm792, 1, 0
        %v960 = vsel %vm793, 1, 0
        %v961 = vsel %vm794, 1, 0
        %v962 = vsel %vm795, 1, 0
        %v963 = vsel %vm796, 1, 0
        %v964 = vsel %vm797, 1, 0
        %v965 = vsel %vm798, 1, 0
        %v966 = vsel %vm799, 1, 0
        %v967 = vsel %vm800, 1, 0
        %v968 = vsel %vm801, 1, 0
        %v969 = vsel %vm802, 1, 0
        %v970 = vsel %vm803, 1, 0
        %v971 = vsel %vm804, 1, 0
        %v972 = vsel %vm805, 1, 0
        %v973 = vsel %vm806, 1, 0
        %v974 = vsel %vm807, 1, 0
        %v975 = vsel %vm808, 1, 0
        %v976 = vsel %vm809, 1, 0
        %v977 = vsel %vm810, 1, 0
        %vm978 = vcmp.eq.s32.totalorder %v946, 1
        %vm979 = vcmp.eq.s32.totalorder %v947, 1
        %vm980 = vcmp.eq.s32.totalorder %v948, 1
        %vm981 = vcmp.eq.s32.totalorder %v949, 1
        %vm982 = vcmp.eq.s32.totalorder %v950, 1
        %vm983 = vcmp.eq.s32.totalorder %v951, 1
        %vm984 = vcmp.eq.s32.totalorder %v952, 1
        %vm985 = vcmp.eq.s32.totalorder %v953, 1
        %vm986 = vcmp.eq.s32.totalorder %v954, 1
        %vm987 = vcmp.eq.s32.totalorder %v955, 1
        %vm988 = vcmp.eq.s32.totalorder %v956, 1
        %vm989 = vcmp.eq.s32.totalorder %v957, 1
        %vm990 = vcmp.eq.s32.totalorder %v958, 1
        %vm991 = vcmp.eq.s32.totalorder %v959, 1
        %vm992 = vcmp.eq.s32.totalorder %v960, 1
        %vm993 = vcmp.eq.s32.totalorder %v961, 1
        %vm994 = vcmp.eq.s32.totalorder %v962, 1
        %vm995 = vcmp.eq.s32.totalorder %v963, 1
        %vm996 = vcmp.eq.s32.totalorder %v964, 1
        %vm997 = vcmp.eq.s32.totalorder %v965, 1
        %vm998 = vcmp.eq.s32.totalorder %v966, 1
        %vm999 = vcmp.eq.s32.totalorder %v967, 1
        %vm1000 = vcmp.eq.s32.totalorder %v968, 1
        %vm1001 = vcmp.eq.s32.totalorder %v969, 1
        %vm1002 = vcmp.eq.s32.totalorder %v970, 1
        %vm1003 = vcmp.eq.s32.totalorder %v971, 1
        %vm1004 = vcmp.eq.s32.totalorder %v972, 1
        %vm1005 = vcmp.eq.s32.totalorder %v973, 1
        %vm1006 = vcmp.eq.s32.totalorder %v974, 1
        %vm1007 = vcmp.eq.s32.totalorder %v975, 1
        %vm1008 = vcmp.eq.s32.totalorder %v976, 1
        %vm1009 = vcmp.eq.s32.totalorder %v977, 1
        %v1010 = vsel %vm978, 0.0, %v914
        %v1011 = vsel %vm979, 0.0, %v915
        %v1012 = vsel %vm980, 0.0, %v916
        %v1013 = vsel %vm981, 0.0, %v917
        %v1014 = vsel %vm982, 0.0, %v918
        %v1015 = vsel %vm983, 0.0, %v919
        %v1016 = vsel %vm984, 0.0, %v920
        %v1017 = vsel %vm985, 0.0, %v921
        %v1018 = vsel %vm986, 0.0, %v922
        %v1019 = vsel %vm987, 0.0, %v923
        %v1020 = vsel %vm988, 0.0, %v924
        %v1021 = vsel %vm989, 0.0, %v925
        %v1022 = vsel %vm990, 0.0, %v926
        %v1023 = vsel %vm991, 0.0, %v927
        %v1024 = vsel %vm992, 0.0, %v928
        %v1025 = vsel %vm993, 0.0, %v929
        %v1026 = vsel %vm994, 0.0, %v930
        %v1027 = vsel %vm995, 0.0, %v931
        %v1028 = vsel %vm996, 0.0, %v932
        %v1029 = vsel %vm997, 0.0, %v933
        %v1030 = vsel %vm998, 0.0, %v934
        %v1031 = vsel %vm999, 0.0, %v935
        %v1032 = vsel %vm1000, 0.0, %v936
        %v1033 = vsel %vm1001, 0.0, %v937
        %v1034 = vsel %vm1002, 0.0, %v938
        %v1035 = vsel %vm1003, 0.0, %v939
        %v1036 = vsel %vm1004, 0.0, %v940
        %v1037 = vsel %vm1005, 0.0, %v941
        %v1038 = vsel %vm1006, 0.0, %v942
        %v1039 = vsel %vm1007, 0.0, %v943
        %v1040 = vsel %vm1008, 0.0, %v944
        %v1041 = vsel %vm1009, 0.0, %v945
        %vm1042 = vcmask 261120
        %1043 = vst.msk [vmem:[%s274] sm:$0xff] %vm1042, %v1010
        %1044 = vst.msk [vmem:[%s274 + $0x8] sm:$0xff] %vm1042, %v1011
        %1045 = vst.msk [vmem:[%s274 + $0x10] sm:$0xff] %vm1042, %v1012
        %1046 = vst.msk [vmem:[%s274 + $0x18] sm:$0xff] %vm1042, %v1013
        %1047 = vst.msk [vmem:[%s274 + $0x20] sm:$0xff] %vm1042, %v1014
        %1048 = vst.msk [vmem:[%s274 + $0x28] sm:$0xff] %vm1042, %v1015
        %1049 = vst.msk [vmem:[%s274 + $0x30] sm:$0xff] %vm1042, %v1016
        %1050 = vst.msk [vmem:[%s274 + $0x38] sm:$0xff] %vm1042, %v1017
        %1051 = vst.msk [vmem:[%s274 + $0x40] sm:$0xff] %vm1042, %v1018
        %1052 = vst.msk [vmem:[%s274 + $0x48] sm:$0xff] %vm1042, %v1019
        %1053 = vst.msk [vmem:[%s274 + $0x50] sm:$0xff] %vm1042, %v1020
        %1054 = vst.msk [vmem:[%s274 + $0x58] sm:$0xff] %vm1042, %v1021
        %1055 = vst.msk [vmem:[%s274 + $0x60] sm:$0xff] %vm1042, %v1022
        %1056 = vst.msk [vmem:[%s274 + $0x68] sm:$0xff] %vm1042, %v1023
        %1057 = vst.msk [vmem:[%s274 + $0x70] sm:$0xff] %vm1042, %v1024
        %1058 = vst.msk [vmem:[%s274 + $0x78] sm:$0xff] %vm1042, %v1025
        %1059 = vst.msk [vmem:[%s274 + $0x80] sm:$0xff] %vm1042, %v1026
        %1060 = vst.msk [vmem:[%s274 + $0x88] sm:$0xff] %vm1042, %v1027
        %1061 = vst.msk [vmem:[%s274 + $0x90] sm:$0xff] %vm1042, %v1028
        %1062 = vst.msk [vmem:[%s274 + $0x98] sm:$0xff] %vm1042, %v1029
        %1063 = vst.msk [vmem:[%s274 + $0xa0] sm:$0xff] %vm1042, %v1030
        %1064 = vst.msk [vmem:[%s274 + $0xa8] sm:$0xff] %vm1042, %v1031
        %1065 = vst.msk [vmem:[%s274 + $0xb0] sm:$0xff] %vm1042, %v1032
        %1066 = vst.msk [vmem:[%s274 + $0xb8] sm:$0xff] %vm1042, %v1033
        %1067 = vst.msk [vmem:[%s274 + $0xc0] sm:$0xff] %vm1042, %v1034
        %1068 = vst.msk [vmem:[%s274 + $0xc8] sm:$0xff] %vm1042, %v1035
        %1069 = vst.msk [vmem:[%s274 + $0xd0] sm:$0xff] %vm1042, %v1036
        %1070 = vst.msk [vmem:[%s274 + $0xd8] sm:$0xff] %vm1042, %v1037
        %1071 = vst.msk [vmem:[%s274 + $0xe0] sm:$0xff] %vm1042, %v1038
        %1072 = vst.msk [vmem:[%s274 + $0xe8] sm:$0xff] %vm1042, %v1039
        %1073 = vst.msk [vmem:[%s274 + $0xf0] sm:$0xff] %vm1042, %v1040
        %1074 = vst.msk [vmem:[%s274 + $0xf8] sm:$0xff] %vm1042, %v1041
        %v1075 = vsel %vm978, 0.0, 1.0
        %v1076 = vsel %vm979, 0.0, 1.0
        %v1077 = vsel %vm980, 0.0, 1.0
        %v1078 = vsel %vm981, 0.0, 1.0
        %v1079 = vsel %vm982, 0.0, 1.0
        %v1080 = vsel %vm983, 0.0, 1.0
        %v1081 = vsel %vm984, 0.0, 1.0
        %v1082 = vsel %vm985, 0.0, 1.0
        %v1083 = vsel %vm986, 0.0, 1.0
        %v1084 = vsel %vm987, 0.0, 1.0
        %v1085 = vsel %vm988, 0.0, 1.0
        %v1086 = vsel %vm989, 0.0, 1.0
        %v1087 = vsel %vm990, 0.0, 1.0
        %v1088 = vsel %vm991, 0.0, 1.0
        %v1089 = vsel %vm992, 0.0, 1.0
        %v1090 = vsel %vm993, 0.0, 1.0
        %v1091 = vsel %vm994, 0.0, 1.0
        %v1092 = vsel %vm995, 0.0, 1.0
        %v1093 = vsel %vm996, 0.0, 1.0
        %v1094 = vsel %vm997, 0.0, 1.0
        %v1095 = vsel %vm998, 0.0, 1.0
        %v1096 = vsel %vm999, 0.0, 1.0
        %v1097 = vsel %vm1000, 0.0, 1.0
        %v1098 = vsel %vm1001, 0.0, 1.0
        %v1099 = vsel %vm1002, 0.0, 1.0
        %v1100 = vsel %vm1003, 0.0, 1.0
        %v1101 = vsel %vm1004, 0.0, 1.0
        %v1102 = vsel %vm1005, 0.0, 1.0
        %v1103 = vsel %vm1006, 0.0, 1.0
        %v1104 = vsel %vm1007, 0.0, 1.0
        %v1105 = vsel %vm1008, 0.0, 1.0
        %v1106 = vsel %vm1009, 0.0, 1.0
        %1107 = vst.msk [vmem:[%s281] sm:$0xff] %vm1042, %v1075
        %1108 = vst.msk [vmem:[%s281 + $0x8] sm:$0xff] %vm1042, %v1076
        %1109 = vst.msk [vmem:[%s281 + $0x10] sm:$0xff] %vm1042, %v1077
        %1110 = vst.msk [vmem:[%s281 + $0x18] sm:$0xff] %vm1042, %v1078
        %1111 = vst.msk [vmem:[%s281 + $0x20] sm:$0xff] %vm1042, %v1079
        %1112 = vst.msk [vmem:[%s281 + $0x28] sm:$0xff] %vm1042, %v1080
        %1113 = vst.msk [vmem:[%s281 + $0x30] sm:$0xff] %vm1042, %v1081
        %1114 = vst.msk [vmem:[%s281 + $0x38] sm:$0xff] %vm1042, %v1082
        %1115 = vst.msk [vmem:[%s281 + $0x40] sm:$0xff] %vm1042, %v1083
        %1116 = vst.msk [vmem:[%s281 + $0x48] sm:$0xff] %vm1042, %v1084
        %1117 = vst.msk [vmem:[%s281 + $0x50] sm:$0xff] %vm1042, %v1085
        %1118 = vst.msk [vmem:[%s281 + $0x58] sm:$0xff] %vm1042, %v1086
        %1119 = vst.msk [vmem:[%s281 + $0x60] sm:$0xff] %vm1042, %v1087
        %1120 = vst.msk [vmem:[%s281 + $0x68] sm:$0xff] %vm1042, %v1088
        %1121 = vst.msk [vmem:[%s281 + $0x70] sm:$0xff] %vm1042, %v1089
        %1122 = vst.msk [vmem:[%s281 + $0x78] sm:$0xff] %vm1042, %v1090
        %1123 = vst.msk [vmem:[%s281 + $0x80] sm:$0xff] %vm1042, %v1091
        %1124 = vst.msk [vmem:[%s281 + $0x88] sm:$0xff] %vm1042, %v1092
        %1125 = vst.msk [vmem:[%s281 + $0x90] sm:$0xff] %vm1042, %v1093
        %1126 = vst.msk [vmem:[%s281 + $0x98] sm:$0xff] %vm1042, %v1094
        %1127 = vst.msk [vmem:[%s281 + $0xa0] sm:$0xff] %vm1042, %v1095
        %1128 = vst.msk [vmem:[%s281 + $0xa8] sm:$0xff] %vm1042, %v1096
        %1129 = vst.msk [vmem:[%s281 + $0xb0] sm:$0xff] %vm1042, %v1097
        %1130 = vst.msk [vmem:[%s281 + $0xb8] sm:$0xff] %vm1042, %v1098
        %1131 = vst.msk [vmem:[%s281 + $0xc0] sm:$0xff] %vm1042, %v1099
        %1132 = vst.msk [vmem:[%s281 + $0xc8] sm:$0xff] %vm1042, %v1100
        %1133 = vst.msk [vmem:[%s281 + $0xd0] sm:$0xff] %vm1042, %v1101
        %1134 = vst.msk [vmem:[%s281 + $0xd8] sm:$0xff] %vm1042, %v1102
        %1135 = vst.msk [vmem:[%s281 + $0xe0] sm:$0xff] %vm1042, %v1103
        %1136 = vst.msk [vmem:[%s281 + $0xe8] sm:$0xff] %vm1042, %v1104
        %1137 = vst.msk [vmem:[%s281 + $0xf0] sm:$0xff] %vm1042, %v1105
        %1138 = vst.msk [vmem:[%s281 + $0xf8] sm:$0xff] %vm1042, %v1106
        %s1139 = sand.u32 %s143, 1
        %s1140 = scalar_lea.sflag [#allocation3], %s1139
        %s1141 = sand.u32 %s143, 1
        %s1142 = smul.addr %s1141, 256
        %s1143 = scalar_lea.vmem [#allocation2], %s1142
        %s1144 = sand.u32 %s171, 1
        %s1145 = scalar_lea.sflag [#allocation5], %s1144
        %s1146 = sand.u32 %s171, 1
        %s1147 = smul.addr %s1146, 256
        %s1148 = scalar_lea.vmem [#allocation4], %s1147
        // Predicated region
        $region37: #{_lambda_.1} parent=35 // pred_check
          %p1149 = pneg %p153
        $region38: #{_lambda_.1} parent=35 // pred_check_branch
          %1151 = sbr.rel (%p1149) target = $region40
        $region39: #{_lambda_.1} parent=35 // pred_region
          %s1152 = smul.u32 32, %s28
          %s1154 = ssub.s32 4096, 4096
          %1155 = vsyncadd %s1140, %s1154
          %s1156 = smul.addr %s27, 32
          %s1157 = sadd.s32 %s1152, %s1156
          %s1158 = smul.addr %s1157, 128
          %s1159 = scalar_lea.hbm %s4, %s1158
          %s1160 = sshll.u32 %s1143, 4
          %s1161 = int_to_ptr.vmem [resolvable:$true] %s1160
          %1166 = dma.vmem_to_hbm [thread:$0]  %s1161, 4096, %s1159, %s1140, 128, 128, 8
        $region40: #{_lambda_.1} parent=35 // pred_fallthru
          _
        // Predicated region
        $region41: #{_lambda_.1} parent=35 // pred_check
          %p1167 = pneg %p181
        $region42: #{_lambda_.1} parent=35 // pred_check_branch
          %1169 = sbr.rel (%p1167) target = $region44
        $region43: #{_lambda_.1} parent=35 // pred_region
          %s1170 = smul.u32 32, %s28
          %s1172 = ssub.s32 4096, 4096
          %1173 = vsyncadd %s1145, %s1172
          %s1174 = smul.addr %s27, 32
          %s1175 = sadd.s32 %s1170, %s1174
          %s1176 = smul.addr %s1175, 128
          %s1177 = scalar_lea.hbm %s5, %s1176
          %s1178 = sshll.u32 %s1148, 4
          %s1179 = int_to_ptr.vmem [resolvable:$true] %s1178
          %1184 = dma.vmem_to_hbm [thread:$0]  %s1179, 4096, %s1177, %s1145, 128, 128, 8
        $region44: #{_lambda_.1} parent=35 // pred_fallthru
          _
      $region36: #{_lambda_.1} parent=5 // pred_fallthru
        _
      %p1185 = scmp.le.s32.totalorder 2, %s18
      // Predicated region
      $region45: #{_lambda_.1} parent=5 // pred_check
        %p1186 = pneg %p1185
      $region46: #{_lambda_.1} parent=5 // pred_check_branch
        %1188 = sbr.rel (%p1186) target = $region48
      $region47: #{_lambda_.1} parent=5 // pred_region
        %s1189 = ssub.s32 %s18, 2
        // Predicated region
        $region49: #{_lambda_.1} parent=47 // pred_check
          %p1190 = pneg %p159
        $region50: #{_lambda_.1} parent=47 // pred_check_branch
          %1192 = sbr.rel (%p1190) target = $region52
        $region51: #{_lambda_.1} parent=47 // pred_region
          %s1193 = sand.u32 %s144, 1
          %s1194 = scalar_lea.sflag [#allocation3], %s1193
          %s1195 = sand.u32 %s144, 1
          %s1196 = smul.addr %s1195, 256
          %s1197 = scalar_lea.vmem [#allocation2], %s1196
          %1198 = dma.done %s1194, 4096
        $region52: #{_lambda_.1} parent=47 // pred_fallthru
          _
        // Predicated region
        $region53: #{_lambda_.1} parent=47 // pred_check
          %p1199 = pneg %p187
        $region54: #{_lambda_.1} parent=47 // pred_check_branch
          %1201 = sbr.rel (%p1199) target = $region56
        $region55: #{_lambda_.1} parent=47 // pred_region
          %s1202 = sand.u32 %s172, 1
          %s1203 = scalar_lea.sflag [#allocation5], %s1202
          %s1204 = sand.u32 %s172, 1
          %s1205 = smul.addr %s1204, 256
          %s1206 = scalar_lea.vmem [#allocation4], %s1205
          %1207 = dma.done %s1203, 4096
        $region56: #{_lambda_.1} parent=47 // pred_fallthru
          _
      $region48: #{_lambda_.1} parent=5 // pred_fallthru
        _
    $region6: #{_lambda_.1} parent=1 // loop_footer
      %s22 = sadd.s32 1, %s18
    $region7: #{_lambda_.1} parent=1 // loop_footer_branch
      %17 = sbr.rel target = $region3
    $region8: #{_lambda_.1} parent=1 // loop_exit
      _
    %1208 = vsyncpa [#allocation3], 1
    %s1209 = scalar_lea.sflag [#allocation3], 1
    %1210 = vsyncpa %s1209, 1
    %1211 = vsyncpa [#allocation5], 1
    %s1212 = scalar_lea.sflag [#allocation5], 1
    %1213 = vsyncpa %s1212, 1

</llo_original>
